<compile_context>
chip_gen: v7x
topology: tpu7x:2x2x1
jax: 0.10.0
libtpu: 0.0.40
codegen_flags: <defaults>
</compile_context>

<pallas_src>
import functools

import jax
import jax.numpy as jnp
from jax import lax
from jax.experimental import pallas as pl
from jax.experimental.pallas import tpu as pltpu

LANE = 128     # lane width of a vreg
SUB = 8        # sublane tile
TM_MAX = 2048  # rows per grid step (2 in x 2 bufs x 2048x128x4B = 4 MiB VMEM)


def _round_up(x, m):
    return (x + m - 1) // m * m


def _cdiv(a, b):
    return -(-a // b)


def _msle_kernel(pred_ref, true_ref, out_ref, acc_ref, *,
                 tm, steps_per_shard, total_elems, needs_mask):
    s = pl.program_id(0)   # parallel shard axis (megacore on v7x)
    i = pl.program_id(1)   # sequential reduction axis within a shard

    @pl.when(i == 0)
    def _():
        acc_ref[...] = jnp.zeros_like(acc_ref)

    # In-kernel cast: 16-bit upstream tensors stay 16-bit in HBM (halves reads).
    p = pred_ref[...].astype(jnp.float32)
    t = true_ref[...].astype(jnp.float32)
    d = jnp.log1p(p) - jnp.log1p(t)
    sq = d * d

    if needs_mask:
        # Mask padded / out-of-range elements using the *logical* block index.
        # (The index_map clamps reads to the last valid block; the mask zeroes
        # any duplicated or out-of-bounds contribution, so garbage / NaN from
        # unspecified OOB reads never reaches the accumulator.)
        logical_block = s * steps_per_shard + i
        row = lax.broadcasted_iota(jnp.int32, (tm, LANE), 0)
        col = lax.broadcasted_iota(jnp.int32, (tm, LANE), 1)
        gidx = (logical_block * tm + row) * LANE + col
        sq = jnp.where(gidx < total_elems, sq, 0.0)

    # Lane-resident accumulation: fold TM rows down to 8 sublanes with pure
    # VPU vector adds (no cross-lane XLU work, no SMEM scalar dependency chain).
    acc_ref[...] += sq.reshape(tm // SUB, SUB, LANE).sum(axis=0)

    # One partial (8,128) slab per shard; final reduce + divide is done outside.
    @pl.when(i == pl.num_programs(1) - 1)
    def _():
        out_ref[...] = acc_ref[...]


def custom_loss(y_pred, y_true):
    assert y_pred.shape == y_true.shape
    total = int(y_pred.size)

    pred = y_pred.reshape(-1)
    true = y_true.reshape(-1)

    # Only pad when the element count is not a lane multiple (<= 127 elements);
    # typical NN tensors (like the NCHW test shape) take the zero-copy path.
    lane_pad = (-total) % LANE
    if lane_pad:
        pred = jnp.pad(pred, (0, lane_pad))
        true = jnp.pad(true, (0, lane_pad))

    m = (total + lane_pad) // LANE
    pred2 = pred.reshape(m, LANE)
    true2 = true.reshape(m, LANE)

    # Tile selection: biggest row tile that fits the VMEM budget; tiny inputs
    # collapse to a single grid step automatically.
    tm = min(TM_MAX, _round_up(m, SUB))
    n_row_blocks = _cdiv(m, tm)
    n_shards = 2 if n_row_blocks >= 2 else 1      # both v7x TCs stream data
    steps = _cdiv(n_row_blocks, n_shards)
    covered = n_shards * steps * tm * LANE
    needs_mask = covered != total

    def in_map(s, i):
        # Clamp so a ragged shard never indexes past the array; the in-kernel
        # mask (driven by the *logical* index) zeroes duplicated contributions.
        return (jnp.minimum(s * steps + i, n_row_blocks - 1), 0)

    kernel = functools.partial(
        _msle_kernel,
        tm=tm,
        steps_per_shard=steps,
        total_elems=total,
        needs_mask=needs_mask,
    )

    partials = pl.pallas_call(
        kernel,
        out_shape=jax.ShapeDtypeStruct((n_shards * SUB, LANE), jnp.float32),
        grid_spec=pltpu.PrefetchScalarGridSpec(
            num_scalar_prefetch=0,
            grid=(n_shards, steps),
            in_specs=[
                pl.BlockSpec((tm, LANE), in_map),
                pl.BlockSpec((tm, LANE), in_map),
            ],
            out_specs=pl.BlockSpec((SUB, LANE), lambda s, i: (s, 0)),
            scratch_shapes=[pltpu.VMEM((SUB, LANE), jnp.float32)],
        ),
        compiler_params=pltpu.CompilerParams(
            dimension_semantics=("parallel", "arbitrary"),
        ),
    )(pred2, true2)

    # Tiny final cross-lane reduce + mean outside the kernel.
    return jnp.sum(partials) / jnp.float32(total)


def _ref_loss(y_pred, y_true):
    d = jnp.log1p(y_pred) - jnp.log1p(y_true)
    return jnp.mean(d * d)


if __name__ == "__main__":
    key = jax.random.PRNGKey(0)
    k1, k2 = jax.random.split(key)
    # Non-negative inputs (log1p domain), NCHW shape consistent with the module.
    y_pred = jax.random.uniform(k1, (2, 4, 16, 16), dtype=jnp.float32, maxval=2.0)
    y_true = jax.random.uniform(k2, (2, 4, 16, 16), dtype=jnp.float32, maxval=2.0)

    loss = custom_loss(y_pred, y_true)
    jax.block_until_ready(loss)

    ref = _ref_loss(y_pred.astype(jnp.float32), y_true.astype(jnp.float32))
    assert jnp.allclose(loss, ref, rtol=1e-5, atol=1e-6), (loss, ref)
    print("KERNEL_OK")
</pallas_src>

<mosaic_0001>
module attributes {stable_mosaic.version = 11 : i64} {
  func.func @_msle_kernel(%arg0: i32, %arg1: i32, %arg2: memref<16x128xf32, #tpu.memory_space<vmem>>, %arg3: memref<16x128xf32, #tpu.memory_space<vmem>>, %arg4: memref<8x128xf32, #tpu.memory_space<vmem>>, %arg5: memref<8x128xf32, #tpu.memory_space<vmem>>) attributes {dimension_semantics = [#tpu.dimension_semantics<parallel>, #tpu.dimension_semantics<arbitrary>], iteration_bounds = array<i64: 1, 1>, scalar_prefetch = 0 : i64, scratch_operands = 1 : i64, tpu.core_type = #tpu.core_type<tc>, window_params = [{transform_indices = @transform_0, window_bounds = array<i64: 16, 128>}, {transform_indices = @transform_1, window_bounds = array<i64: 16, 128>}, {transform_indices = @transform_2, window_bounds = array<i64: 8, 128>}]} {
    %c0_i32 = arith.constant 0 : i32
    %0 = arith.cmpi eq, %arg1, %c0_i32 : i32
    %1 = arith.extui %0 : i1 to i32
    %c0_i32_0 = arith.constant 0 : i32
    %2 = arith.cmpi ne, %1, %c0_i32_0 : i32
    scf.if %2 {
      %cst_10 = arith.constant 0.000000e+00 : f32
      %17 = vector.broadcast %cst_10 : f32 to vector<8x128xf32>
      %c0_11 = arith.constant 0 : index
      %c0_12 = arith.constant 0 : index
      %18 = vector.load %arg5[%c0_11, %c0_12] : memref<8x128xf32, #tpu.memory_space<vmem>>, vector<8x128xf32>
      tpu.vector_store %arg5[%c0_11, %c0_12], %17 {strides = array<i32>} : memref<8x128xf32, #tpu.memory_space<vmem>>, vector<8x128xf32>,
    } else {
    }
    %c0 = arith.constant 0 : index
    %c0_1 = arith.constant 0 : index
    %3 = vector.load %arg2[%c0, %c0_1] : memref<16x128xf32, #tpu.memory_space<vmem>>, vector<16x128xf32>
    %c0_2 = arith.constant 0 : index
    %c0_3 = arith.constant 0 : index
    %4 = vector.load %arg3[%c0_2, %c0_3] : memref<16x128xf32, #tpu.memory_space<vmem>>, vector<16x128xf32>
    %5 = math.log1p %3 : vector<16x128xf32>
    %6 = math.log1p %4 : vector<16x128xf32>
    %7 = arith.subf %5, %6 : vector<16x128xf32>
    %8 = arith.mulf %7, %7 : vector<16x128xf32>
    %c0_4 = arith.constant 0 : index
    %c0_5 = arith.constant 0 : index
    %9 = vector.load %arg5[%c0_4, %c0_5] : memref<8x128xf32, #tpu.memory_space<vmem>>, vector<8x128xf32>
    %10 = vector.shape_cast %8 : vector<16x128xf32> to vector<2x8x128xf32>
    %cst = arith.constant dense<0.000000e+00> : vector<8x128xf32>
    %11 = vector.multi_reduction <add>, %10, %cst [0] : vector<2x8x128xf32> to vector<8x128xf32>
    %12 = arith.addf %9, %11 : vector<8x128xf32>
    %c0_6 = arith.constant 0 : index
    %c0_7 = arith.constant 0 : index
    %13 = vector.load %arg5[%c0_6, %c0_7] : memref<8x128xf32, #tpu.memory_space<vmem>>, vector<8x128xf32>
    tpu.vector_store %arg5[%c0_6, %c0_7], %12 {strides = array<i32>} : memref<8x128xf32, #tpu.memory_space<vmem>>, vector<8x128xf32>,
    %c0_i32_8 = arith.constant 0 : i32
    %14 = arith.cmpi eq, %arg1, %c0_i32_8 : i32
    %15 = arith.extui %14 : i1 to i32
    %c0_i32_9 = arith.constant 0 : i32
    %16 = arith.cmpi ne, %15, %c0_i32_9 : i32
    scf.if %16 {
      %c0_10 = arith.constant 0 : index
      %c0_11 = arith.constant 0 : index
      %17 = vector.load %arg5[%c0_10, %c0_11] : memref<8x128xf32, #tpu.memory_space<vmem>>, vector<8x128xf32>
      %c0_12 = arith.constant 0 : index
      %c0_13 = arith.constant 0 : index
      %18 = vector.load %arg4[%c0_12, %c0_13] : memref<8x128xf32, #tpu.memory_space<vmem>>, vector<8x128xf32>
      tpu.vector_store %arg4[%c0_12, %c0_13], %17 {strides = array<i32>} : memref<8x128xf32, #tpu.memory_space<vmem>>, vector<8x128xf32>,
    } else {
    }
    return
  }
  func.func @transform_0(%arg0: i32, %arg1: i32) -> (i32, i32) {
    %c1_i32 = arith.constant 1 : i32
    %0 = arith.muli %arg0, %c1_i32 : i32
    %1 = arith.addi %0, %arg1 : i32
    %c0_i32 = arith.constant 0 : i32
    %2 = arith.minsi %1, %c0_i32 : i32
    %c0_i32_0 = arith.constant 0 : i32
    %c0_i32_1 = arith.constant 0 : i32
    return %2, %c0_i32_0 : i32, i32
  }
  func.func @transform_1(%arg0: i32, %arg1: i32) -> (i32, i32) {
    %c1_i32 = arith.constant 1 : i32
    %0 = arith.muli %arg0, %c1_i32 : i32
    %1 = arith.addi %0, %arg1 : i32
    %c0_i32 = arith.constant 0 : i32
    %2 = arith.minsi %1, %c0_i32 : i32
    %c0_i32_0 = arith.constant 0 : i32
    %c0_i32_1 = arith.constant 0 : i32
    return %2, %c0_i32_0 : i32, i32
  }
  func.func @transform_2(%arg0: i32, %arg1: i32) -> (i32, i32) {
    %c0_i32 = arith.constant 0 : i32
    %c0_i32_0 = arith.constant 0 : i32
    return %arg0, %c0_i32 : i32, i32
  }
}

</mosaic_0001>

<llo_original>
// kernel: tpu_custom_call.1
$region0: #{tpu_custom_call.1}
  #allocation0 [shape = 'u32[]', space=smem, size = 0x4, offset = 0x4, fixed_abs, tag = 'smem constant byte address 0x4 - core index']
  #allocation1 [shape = 'u32[144,128]{1,0:T(1,128)}', space=vmem, size = 0x12000, scoped, tag = 'internal scratch']
  #allocation2 [shape = 'f32[8,128]{1,0:T(8,128)}', space=vmem, size = 0x1000, scoped, tag = 'scratch operand']
  %s0 = inlined_call_operand.hbm [shape: f32[16,128], index: 0, kind: input, shape index: {}]
  %s1 = inlined_call_operand.hbm [shape: f32[16,128], index: 1, kind: input, shape index: {}]
  %s2 = inlined_call_operand.hbm [shape: f32[8,128], index: 2, kind: output, shape index: {}]
  %s3 = sld [smem:[#allocation0]]
  $region34: #{tpu_custom_call.1} parent=0
    _
  %s5 = ssub.s32 1, %s3
  %s6 = scalar_select 0, %s5, %s3
  $region1: #{tpu_custom_call.1} parent=0
    #allocation3 [shape = 'u8[8192]{0}', space=vmem, size = 0x2000, scoped, tag = 'input window, operand 0, single buffered']
    #allocation4 [shape = 's32[1]{0}', space=sflag, size = 0x4, scoped, tag = 'scoped memory for tpu_custom_call.1']
    #allocation5 [shape = 's32[1]{0}', space=sflag, size = 0x4, scoped, tag = 'scoped memory for tpu_custom_call.1']
    #allocation6 [shape = 'u8[8192]{0}', space=vmem, size = 0x2000, scoped, tag = 'input window, operand 1, single buffered']
    #allocation7 [shape = 's32[1]{0}', space=sflag, size = 0x4, scoped, tag = 'scoped memory for tpu_custom_call.1']
    #allocation8 [shape = 'u8[4096]{0}', space=vmem, size = 0x1000, scoped, tag = 'output window, operand 0, single buffered']
    %7 = vsyncpa [#allocation4], 0
    %8 = vsyncpa [#allocation7], 0
    %9 = vsyncpa [#allocation5], 0
    // Predicated region
    $region2: #{tpu_custom_call.1} parent=1 // pred_check
      _
    $region3: #{tpu_custom_call.1} parent=1 // pred_check_branch
      %11 = sbr.rel (0) target = $region5
    $region4: #{tpu_custom_call.1} parent=1 // pred_region
      %s12 = sadd.s32 0, 0
      %p13 = scmp.lt.s32.totalorder %s12, 0
      %s14 = scalar_select %p13, %s12, 0
      %s15 = smul.u32 2, %s14
      %s17 = ssub.s32 256, 256
      %18 = vsyncadd [#allocation4], %s17
      %s19 = smul.addr %s15, 128
      %s20 = scalar_lea.hbm %s0, %s19
      %s21 = sshll.u32 [#allocation3], 4
      %s22 = int_to_ptr.vmem [resolvable:$true] %s21
      %27 = dma.hbm_to_vmem [thread:$0]  %s20, 256, %s22, [#allocation4], 128, 128, 8
    $region5: #{tpu_custom_call.1} parent=1 // pred_fallthru
      _
    // Predicated region
    $region6: #{tpu_custom_call.1} parent=1 // pred_check
      _
    $region7: #{tpu_custom_call.1} parent=1 // pred_check_branch
      %29 = sbr.rel (0) target = $region9
    $region8: #{tpu_custom_call.1} parent=1 // pred_region
      %s30 = sadd.s32 0, 0
      %p31 = scmp.lt.s32.totalorder %s30, 0
      %s32 = scalar_select %p31, %s30, 0
      %s33 = smul.u32 2, %s32
      %s35 = ssub.s32 256, 256
      %36 = vsyncadd [#allocation7], %s35
      %s37 = smul.addr %s33, 128
      %s38 = scalar_lea.hbm %s1, %s37
      %s39 = sshll.u32 [#allocation6], 4
      %s40 = int_to_ptr.vmem [resolvable:$true] %s39
      %45 = dma.hbm_to_vmem [thread:$0]  %s38, 256, %s40, [#allocation7], 128, 128, 8
    $region9: #{tpu_custom_call.1} parent=1 // pred_fallthru
      _
    // Predicated region
    $region10: #{tpu_custom_call.1} parent=1 // pred_check
      _
    $region11: #{tpu_custom_call.1} parent=1 // pred_check_branch
      %47 = sbr.rel (0) target = $region13
    $region12: #{tpu_custom_call.1} parent=1 // pred_region
      %48 = dma.done [#allocation4], 256
    $region13: #{tpu_custom_call.1} parent=1 // pred_fallthru
      _
    // Predicated region
    $region14: #{tpu_custom_call.1} parent=1 // pred_check
      _
    $region15: #{tpu_custom_call.1} parent=1 // pred_check_branch
      %50 = sbr.rel (0) target = $region17
    $region16: #{tpu_custom_call.1} parent=1 // pred_region
      %51 = dma.done [#allocation7], 256
    $region17: #{tpu_custom_call.1} parent=1 // pred_fallthru
      _
    %s52 = sadd.s32 0, 0
    %p53 = scmp.lt.s32.totalorder %s52, 0
    %s54 = scalar_select %p53, %s52, 0
    %s55 = smul.u32 2, %s54
    %s56 = sadd.s32 0, 0
    %p57 = scmp.lt.s32.totalorder %s56, 0
    %s58 = scalar_select %p57, %s56, 0
    %s59 = smul.u32 2, %s58
    %p60 = scmp.eq.s32.totalorder 0, 0
    // Predicated region
    $region18: #{tpu_custom_call.1} parent=1 // pred_check
      %p61 = pneg %p60
    $region19: #{tpu_custom_call.1} parent=1 // pred_check_branch
      %63 = sbr.rel (%p61) target = $region21
    $region20: #{tpu_custom_call.1} parent=1 // pred_region
      %64 = vst [vmem:[#allocation2] sm:$0xff] 0.0
    $region21: #{tpu_custom_call.1} parent=1 // pred_fallthru
      _
    %v65 = vld [vmem:[#allocation3] sm:$0xff]
    %v66 = vld [vmem:[#allocation3 + $0x8] sm:$0xff]
    %v67 = vld [vmem:[#allocation6] sm:$0xff]
    %v68 = vld [vmem:[#allocation6 + $0x8] sm:$0xff]
    %v69 = vadd.f32 %v65, 1.0
    %v70 = vlog2.pop %v69
    %v71 = vmul.f32 %v70, 0.6931472
    %v72 = vmul.f32 -0.5, %v65
    %v73 = vadd.f32 %v72, 1.0
    %v74 = vmul.f32 %v73, %v65
    %v75 = vand.u32 2147483647, %v65
    %vm76 = vcmp.lt.f32.partialorder %v75, 0.0004427343
    %v77 = vsel %vm76, %v74, %v71
    %v78 = vadd.f32 %v66, 1.0
    %v79 = vlog2.pop %v78
    %v80 = vmul.f32 %v79, 0.6931472
    %v81 = vmul.f32 -0.5, %v66
    %v82 = vadd.f32 %v81, 1.0
    %v83 = vmul.f32 %v82, %v66
    %v84 = vand.u32 2147483647, %v66
    %vm85 = vcmp.lt.f32.partialorder %v84, 0.0004427343
    %v86 = vsel %vm85, %v83, %v80
    %v87 = vadd.f32 %v67, 1.0
    %v88 = vlog2.pop %v87
    %v89 = vmul.f32 %v88, 0.6931472
    %v90 = vmul.f32 -0.5, %v67
    %v91 = vadd.f32 %v90, 1.0
    %v92 = vmul.f32 %v91, %v67
    %v93 = vand.u32 2147483647, %v67
    %vm94 = vcmp.lt.f32.partialorder %v93, 0.0004427343
    %v95 = vsel %vm94, %v92, %v89
    %v96 = vadd.f32 %v68, 1.0
    %v97 = vlog2.pop %v96
    %v98 = vmul.f32 %v97, 0.6931472
    %v99 = vmul.f32 -0.5, %v68
    %v100 = vadd.f32 %v99, 1.0
    %v101 = vmul.f32 %v100, %v68
    %v102 = vand.u32 2147483647, %v68
    %vm103 = vcmp.lt.f32.partialorder %v102, 0.0004427343
    %v104 = vsel %vm103, %v101, %v98
    %v105 = vsub.f32 %v77, %v95
    %v106 = vsub.f32 %v86, %v104
    %v107 = vmul.f32 %v105, %v105
    %v108 = vmul.f32 %v106, %v106
    %v109 = vld [vmem:[#allocation2] sm:$0xff]
    %v110 = vadd.f32 %v107, %v108
    %v111 = vadd.f32 %v109, %v110
    %112 = vst [vmem:[#allocation2] sm:$0xff] %v111
    // Predicated region
    $region22: #{tpu_custom_call.1} parent=1 // pred_check
      %p113 = pneg %p60
    $region23: #{tpu_custom_call.1} parent=1 // pred_check_branch
      %115 = sbr.rel (%p113) target = $region25
    $region24: #{tpu_custom_call.1} parent=1 // pred_region
      %v116 = vld [vmem:[#allocation2] sm:$0xff]
      %117 = vst [vmem:[#allocation8] sm:$0xff] %v116
    $region25: #{tpu_custom_call.1} parent=1 // pred_fallthru
      _
    // Predicated region
    $region26: #{tpu_custom_call.1} parent=1 // pred_check
      _
    $region27: #{tpu_custom_call.1} parent=1 // pred_check_branch
      %119 = sbr.rel (0) target = $region29
    $region28: #{tpu_custom_call.1} parent=1 // pred_region
      %s121 = ssub.s32 128, 128
      %122 = vsyncadd [#allocation5], %s121
      %s124 = sshll.u32 [#allocation8], 4
      %s125 = int_to_ptr.vmem [resolvable:$true] %s124
      %127 = dma.vmem_to_hbm [thread:$0]  %s125, 128, %s2, [#allocation5]
    $region29: #{tpu_custom_call.1} parent=1 // pred_fallthru
      _
    // Predicated region
    $region30: #{tpu_custom_call.1} parent=1 // pred_check
      _
    $region31: #{tpu_custom_call.1} parent=1 // pred_check_branch
      %129 = sbr.rel (0) target = $region33
    $region32: #{tpu_custom_call.1} parent=1 // pred_region
      %130 = dma.done [#allocation5], 128
    $region33: #{tpu_custom_call.1} parent=1 // pred_fallthru
      _
    %131 = vsyncpa [#allocation4], 1
    %132 = vsyncpa [#allocation7], 1
    %133 = vsyncpa [#allocation5], 1

</llo_original>
